<compile_context>
chip_gen: v5e
topology: v5e:2x2
jax: 0.10.0
libtpu: 0.0.40
codegen_flags: <defaults>
</compile_context>

<pallas_src>
import math

import jax
import jax.numpy as jnp
from jax.experimental import pallas as pl
from jax.experimental.pallas import tpu as pltpu


# ----------------------------------------------------------------------------
# Interpolation-matrix construction (plain JAX glue, runs once per shape).
# ----------------------------------------------------------------------------
def _scale_pair(scale_factor):
    if isinstance(scale_factor, (tuple, list)):
        sh, sw = scale_factor
    else:
        sh = sw = scale_factor
    return float(sh), float(sw)


def _interp_matrix(in_size: int, out_size: int, scale=None) -> jnp.ndarray:
    """(out_size, in_size) bilinear interpolation matrix, PyTorch align_corners=False.

    When `scale` (the user scale_factor) is provided, PyTorch's default
    (recompute_scale_factor=None) maps coordinates with ratio = 1/scale;
    otherwise it falls back to in/out. Always built in float32.
    """
    if scale is not None and float(scale) > 0:
        ratio = 1.0 / float(scale)
    else:
        ratio = in_size / out_size
    dst = jnp.arange(out_size, dtype=jnp.float32)
    src = (dst + 0.5) * ratio - 0.5
    src = jnp.maximum(src, 0.0)                 # PyTorch clamps negative coords to 0
    i0 = jnp.floor(src).astype(jnp.int32)
    i0 = jnp.minimum(i0, in_size - 1)
    i1 = jnp.minimum(i0 + 1, in_size - 1)
    w1 = src - i0.astype(jnp.float32)
    w0 = 1.0 - w1
    rows = jnp.arange(out_size)
    A = jnp.zeros((out_size, in_size), jnp.float32)
    A = A.at[rows, i0].add(w0)
    A = A.at[rows, i1].add(w1)
    return A


# ----------------------------------------------------------------------------
# Tiling / VMEM budgeting.
# ----------------------------------------------------------------------------
def _round_up(x: int, m: int) -> int:
    return -(-x // m) * m


def _sublane(dtype) -> int:
    # Native sublane tile: 8 (32-bit), 16 (16-bit), 32 (8-bit).
    return max(8, 32 // jnp.dtype(dtype).itemsize)


def _vmem_capacity_bytes() -> int:
    try:
        return int(pltpu.get_tpu_info().vmem_capacity_bytes)
    except Exception:
        return 64 * 1024 * 1024        # conservative (v7x-sized) fallback


def _choose_batch_tile(B, H, W, H_out, W_out, x_dtype, cmp_dtype,
                       budget_bytes, min_steps, max_tb=64):
    """Largest divisor of B that (a) satisfies the block second-minor alignment
    rule, (b) keeps the PADDED, double-buffered working set within budget, and
    (c) leaves >= min_steps grid steps when B permits (pipelining / megacore)."""
    in_b = jnp.dtype(x_dtype).itemsize
    cmp_b = jnp.dtype(cmp_dtype).itemsize
    sub = max(_sublane(x_dtype), _sublane(cmp_dtype))
    Wp, Wop = _round_up(W, 128), _round_up(W_out, 128)

    # Constant A_h / A_wT blocks (double-buffered by the pipeline), padded.
    a_bytes = 2 * cmp_b * (_round_up(H_out, sub) * _round_up(H, 128)
                           + _round_up(W, sub) * Wop)
    # Padded VMEM per (n, c) slice of a tile: 2x input block + 2x output block
    # + stage-1 scratch + the f32 stage-1 result before the downcast.
    per_slice = (2 * H * Wp * in_b
                 + 2 * H_out * Wop * in_b
                 + H * Wop * cmp_b
                 + H * Wop * 4)
    fixed = _round_up(H_out, sub) * Wop * 4       # stage-2 per-dot f32 result
    avail = budget_bytes - a_bytes - fixed
    cap = max(1, min(max_tb, avail // per_slice))

    # Block second-minor dims (TB*H, TB*H_out) must be sublane multiples unless
    # the block spans the whole flattened array (TB == B).
    m_h = sub // math.gcd(H, sub)
    m_o = sub // math.gcd(H_out, sub)
    m = m_h * m_o // math.gcd(m_h, m_o)
    valid = [d for d in range(1, B + 1) if B % d == 0 and (d % m == 0 or d == B)]
    within = [d for d in valid if d <= cap]
    if not within:
        return valid[0]                           # smallest legal tile
    stepped = [d for d in within if B // d >= min_steps]
    return max(stepped) if stepped else max(within)


# ----------------------------------------------------------------------------
# Pallas kernel.
# ----------------------------------------------------------------------------
def _bilinear_up_kernel(ah_ref, awt_ref, x_ref, o_ref, t_ref):
    # ah_ref : (H_out, H)        row-interpolation matrix (compute dtype)
    # awt_ref: (W,     W_out)    transposed column-interpolation matrix
    # x_ref  : (TB*H,  W)        TB flattened (n, c) input slices
    # o_ref  : (TB*H_out, W_out)
    # t_ref  : (TB*H,  W_out)    VMEM scratch, compute dtype
    h_out, h = ah_ref.shape
    tb = x_ref.shape[0] // h
    cdt = ah_ref.dtype

    # Stage 1: one flat, lane-dense MXU matmul over the whole tile,
    # (TB*H, W) @ (W, W_out) with f32 accumulation; input read & cast once.
    t_ref[...] = jnp.dot(x_ref[...].astype(cdt), awt_ref[...],
                         preferred_element_type=jnp.float32).astype(cdt)

    # Stage 2: per-slice row upsample (H_out, H) @ (H, W_out) written straight
    # into o_ref rows. After the contraction swap there are no cross-iteration
    # live values (no accumulators), and static slice starts avoid any
    # unaligned dynamic-store lowering when H / H_out are not sublane multiples.
    ah = ah_ref[...]
    for b in range(tb):
        o_ref[pl.ds(b * h_out, h_out), :] = jnp.dot(
            ah, t_ref[pl.ds(b * h, h), :],
            preferred_element_type=jnp.float32).astype(o_ref.dtype)


# ----------------------------------------------------------------------------
# Wrapper.
# ----------------------------------------------------------------------------
def bilinear_up(x: jnp.ndarray, scale_factor) -> jnp.ndarray:
    """x: (N, C, H, W) -> (N, C, floor(H*s), floor(W*s)); PyTorch bilinear,
    align_corners=False."""
    N, C, H, W = x.shape
    sh, sw = _scale_pair(scale_factor)
    H_out = int(math.floor(H * sh))
    W_out = int(math.floor(W * sw))

    # bf16 operands only when the input is bf16 (halves HBM traffic, full-rate
    # MXU; 0.25/0.75-style weights of integer scales are exact in bf16).
    # f32 inputs keep full precision. Accumulation is always f32 on the MXU.
    compute_dtype = jnp.bfloat16 if x.dtype == jnp.bfloat16 else jnp.float32

    A_h = _interp_matrix(H, H_out, sh).astype(compute_dtype)      # (H_out, H)
    A_wT = _interp_matrix(W, W_out, sw).T.astype(compute_dtype)   # (W, W_out)

    B = N * C
    x2 = x.reshape(B * H, W)          # contiguous -> free metadata reshape

    # Per-generation VMEM budget / limit (v7x: 64 MiB, v5e/v6e: 128 MiB).
    vmem_cap = _vmem_capacity_bytes()
    budget = max(12 << 20, int(0.30 * vmem_cap))
    vmem_limit = min(int(0.65 * vmem_cap), 100 << 20)
    # v7x shards the "parallel" axis across 2 TensorCores -> want >= 4 steps
    # per core; single-TC generations still want >= 4 steps for pipelining.
    min_steps = 8 if vmem_cap <= (64 << 20) else 4

    TB = _choose_batch_tile(B, H, W, H_out, W_out, x.dtype, compute_dtype,
                            budget, min_steps)
    grid = (B // TB,)

    in_bytes = jnp.dtype(x.dtype).itemsize
    cmp_bytes = jnp.dtype(compute_dtype).itemsize
    cost = pl.CostEstimate(
        flops=2 * B * W_out * H * (W + H_out),
        transcendentals=0,
        bytes_accessed=B * (H * W + H_out * W_out) * in_bytes
                       + (H_out * H + W * W_out) * cmp_bytes,
    )

    out = pl.pallas_call(
        _bilinear_up_kernel,
        out_shape=jax.ShapeDtypeStruct((B * H_out, W_out), x.dtype),
        grid_spec=pltpu.PrefetchScalarGridSpec(
            num_scalar_prefetch=0,
            grid=grid,
            in_specs=[
                pl.BlockSpec((H_out, H), lambda i: (0, 0)),        # A_h (constant)
                pl.BlockSpec((W, W_out), lambda i: (0, 0)),        # A_w^T (constant)
                pl.BlockSpec((TB * H, W), lambda i: (i, 0)),       # input row-tile
            ],
            out_specs=pl.BlockSpec((TB * H_out, W_out), lambda i: (i, 0)),
            scratch_shapes=[pltpu.VMEM((TB * H, W_out), compute_dtype)],
        ),
        compiler_params=pltpu.CompilerParams(
            dimension_semantics=("parallel",),
            vmem_limit_bytes=vmem_limit,
        ),
        cost_estimate=cost,
    )(A_h, A_wT, x2)

    return out.reshape(N, C, H_out, W_out)


def bilinear_up_ref(x: jnp.ndarray, scale_factor) -> jnp.ndarray:
    """Plain-JAX reference with identical semantics, for validation."""
    N, C, H, W = x.shape
    sh, sw = _scale_pair(scale_factor)
    H_out = int(math.floor(H * sh))
    W_out = int(math.floor(W * sw))
    A_h = _interp_matrix(H, H_out, sh)
    A_w = _interp_matrix(W, W_out, sw)
    y = jnp.einsum("oh,nchw,pw->ncop", A_h, x.astype(jnp.float32), A_w)
    return y.astype(x.dtype)


if __name__ == "__main__":
    key = jax.random.PRNGKey(0)
    k1, k2 = jax.random.split(key)

    # Case 1: f32, 16x16, x2.
    N, C, H, W = 2, 4, 16, 16
    scale = 2
    x = jax.random.normal(k1, (N, C, H, W), dtype=jnp.float32)
    y = jax.block_until_ready(bilinear_up(x, scale))
    assert y.shape == (N, C, H * scale, W * scale), y.shape
    y_ref = bilinear_up_ref(x, scale)
    err = float(jnp.max(jnp.abs(y - y_ref)))
    assert err < 1e-4, f"f32 max abs err {err}"

    # Case 2: bf16 with odd shapes (H_out not a multiple of 8, W/W_out << 128)
    # exercises sublane-unaligned slices and the lane-masked store path.
    xb = jax.random.normal(k2, (2, 4, 10, 12), dtype=jnp.bfloat16)
    yb = jax.block_until_ready(bilinear_up(xb, 2))
    assert yb.shape == (2, 4, 20, 24), yb.shape
    yb_ref = bilinear_up_ref(xb.astype(jnp.float32), 2)
    errb = float(jnp.max(jnp.abs(yb.astype(jnp.float32) - yb_ref)))
    assert errb < 6e-2, f"bf16 max abs err {errb}"

    print("KERNEL_OK")
</pallas_src>

<mosaic_0001>
module attributes {stable_mosaic.version = 11 : i64} {
  func.func @_bilinear_up_kernel(%arg0: i32, %arg1: memref<32x16xf32, #tpu.memory_space<vmem>>, %arg2: memref<16x32xf32, #tpu.memory_space<vmem>>, %arg3: memref<16x16xf32, #tpu.memory_space<vmem>>, %arg4: memref<32x32xf32, #tpu.memory_space<vmem>>, %arg5: memref<16x32xf32, #tpu.memory_space<vmem>>) attributes {dimension_semantics = [#tpu.dimension_semantics<parallel>], iteration_bounds = array<i64: 8>, scalar_prefetch = 0 : i64, scratch_operands = 1 : i64, tpu.core_type = #tpu.core_type<tc>, window_params = [{pipeline_mode = #tpu.pipeline_mode<synchronous>, transform_indices = @transform_0, window_bounds = array<i64: 32, 16>}, {pipeline_mode = #tpu.pipeline_mode<synchronous>, transform_indices = @transform_1, window_bounds = array<i64: 16, 32>}, {transform_indices = @transform_2, window_bounds = array<i64: 16, 16>}, {transform_indices = @transform_3, window_bounds = array<i64: 32, 32>}]} {
    %c0 = arith.constant 0 : index
    %c0_0 = arith.constant 0 : index
    %0 = vector.load %arg3[%c0, %c0_0] : memref<16x16xf32, #tpu.memory_space<vmem>>, vector<16x16xf32>
    %c0_1 = arith.constant 0 : index
    %c0_2 = arith.constant 0 : index
    %1 = vector.load %arg2[%c0_1, %c0_2] : memref<16x32xf32, #tpu.memory_space<vmem>>, vector<16x32xf32>
    %cst = arith.constant dense<0.000000e+00> : vector<16x32xf32>
    %2 = tpu.matmul %0, %1, %cst {dimension_numbers = #tpu.dot_dimension_numbers<[1], [0], [0], [1], [0, 0, 1, 1], [], []>} : vector<16x16xf32>, vector<16x32xf32>, vector<16x32xf32> -> vector<16x32xf32>
    %c0_3 = arith.constant 0 : index
    %c0_4 = arith.constant 0 : index
    %3 = vector.load %arg5[%c0_3, %c0_4] : memref<16x32xf32, #tpu.memory_space<vmem>>, vector<16x32xf32>
    tpu.vector_store %arg5[%c0_3, %c0_4], %2 {strides = array<i32>} : memref<16x32xf32, #tpu.memory_space<vmem>>, vector<16x32xf32>,
    %c0_5 = arith.constant 0 : index
    %c0_6 = arith.constant 0 : index
    %4 = vector.load %arg1[%c0_5, %c0_6] : memref<32x16xf32, #tpu.memory_space<vmem>>, vector<32x16xf32>
    %c0_7 = arith.constant 0 : index
    %c0_8 = arith.constant 0 : index
    %5 = vector.load %arg5[%c0_7, %c0_8] : memref<16x32xf32, #tpu.memory_space<vmem>>, vector<16x32xf32>
    %cst_9 = arith.constant dense<0.000000e+00> : vector<32x32xf32>
    %6 = tpu.matmul %4, %5, %cst_9 {dimension_numbers = #tpu.dot_dimension_numbers<[1], [0], [0], [1], [0, 0, 1, 1], [], []>} : vector<32x16xf32>, vector<16x32xf32>, vector<32x32xf32> -> vector<32x32xf32>
    %c0_10 = arith.constant 0 : index
    %c0_11 = arith.constant 0 : index
    %7 = vector.load %arg4[%c0_10, %c0_11] : memref<32x32xf32, #tpu.memory_space<vmem>>, vector<32x32xf32>
    tpu.vector_store %arg4[%c0_10, %c0_11], %6 {strides = array<i32>} : memref<32x32xf32, #tpu.memory_space<vmem>>, vector<32x32xf32>,
    return
  }
  func.func @transform_0(%arg0: i32) -> (i32, i32) {
    %c0_i32 = arith.constant 0 : i32
    %c0_i32_0 = arith.constant 0 : i32
    %c0_i32_1 = arith.constant 0 : i32
    return %c0_i32, %c0_i32_0 : i32, i32
  }
  func.func @transform_1(%arg0: i32) -> (i32, i32) {
    %c0_i32 = arith.constant 0 : i32
    %c0_i32_0 = arith.constant 0 : i32
    %c0_i32_1 = arith.constant 0 : i32
    return %c0_i32, %c0_i32_0 : i32, i32
  }
  func.func @transform_2(%arg0: i32) -> (i32, i32) {
    %c0_i32 = arith.constant 0 : i32
    %c0_i32_0 = arith.constant 0 : i32
    return %arg0, %c0_i32 : i32, i32
  }
  func.func @transform_3(%arg0: i32) -> (i32, i32) {
    %c0_i32 = arith.constant 0 : i32
    %c0_i32_0 = arith.constant 0 : i32
    return %arg0, %c0_i32 : i32, i32
  }
}

</mosaic_0001>

<llo_original>
// kernel: tpu_custom_call.1
$region0: #{tpu_custom_call.1}
  #allocation0 [shape = 'u32[]', space=smem, size = 0x4, offset = 0x4, fixed_abs, tag = 'smem constant byte address 0x4 - core index']
  #allocation1 [shape = 'u32[72,128]{1,0:T(1,128)}', space=vmem, size = 0x9000, scoped, tag = 'internal scratch']
  #allocation2 [shape = 'f32[16,32]{1,0:T(8,128)}', space=vmem, size = 0x2000, scoped, tag = 'scratch operand']
  %s0 = inlined_call_operand.vmem [shape: f32[32,16], index: 0, kind: input, shape index: {}]
  %s1 = inlined_call_operand.vmem [shape: f32[16,32], index: 1, kind: input, shape index: {}]
  %s2 = inlined_call_operand.vmem [shape: f32[128,16], index: 2, kind: input, shape index: {}]
  %s3 = inlined_call_operand.vmem [shape: f32[256,32], index: 3, kind: output, shape index: {}]
  %s4 = sld [smem:[#allocation0]]
  $region45: #{tpu_custom_call.1} parent=0
    _
  %s6 = ssub.s32 1, %s4
  %s7 = scalar_select 0, %s6, %s4
  loop: start=0, step=1, limit=10
  $region2: #{tpu_custom_call.1} parent=0 // loop_pre_header
    _
  $region3: #{tpu_custom_call.1} parent=0 // loop_header
    %s9 = sphi 0, %s13
    %p10 = scmp.ge.s32.totalorder %s9, 10
    %s17 = sphi 0, %s17
    %s19 = sphi 0, %s17
    %s20 = sphi 0, %s19
    %s34 = sphi 0, %s20
    %s38 = sphi 0, %s38
    %s40 = sphi 0, %s38
    %s41 = sphi 0, %s40
    %s55 = sphi 0, %s41
    %s61 = sphi 0, %s63
    %s64 = sphi 0, %s61
    %s65 = sphi 0, %s64
    %s81 = sphi 0, %s65
    %s87 = sphi 0, %s89
    %s90 = sphi 0, %s87
    %s91 = sphi 0, %s90
    %s107 = sphi 0, %s91
  $region4: #{tpu_custom_call.1} parent=0 // loop_header_branch
    %12 = sbr.rel (%p10) target = $region8
  $region5: #{tpu_custom_call.1} parent=0 // loop_body
    %s14 = ssub.s32 %s9, 1
    %s15 = ssub.s32 %s9, 2
    %s16 = sadd.s32 %s9, 1
    %s18 = sadd.s32 %s17, 1
    %p21 = scmp.eq.s32.totalorder %s9, 7
    %p22 = scmp.ne.s32.totalorder %s17, %s19
    %p23 = scmp.eq.s32.totalorder %s9, 0
    %p24 = por %p22, %p23
    %p25 = scmp.ne.s32.totalorder %s17, %s19
    %p26 = scmp.eq.s32.totalorder %s14, 7
    %p27 = por %p25, %p26
    %p28 = scmp.ne.s32.totalorder %s19, %s20
    %p29 = scmp.eq.s32.totalorder %s14, 0
    %p30 = por %p28, %p29
    %p31 = scmp.ne.s32.totalorder %s19, %s20
    %p32 = scmp.eq.s32.totalorder %s15, 7
    %p33 = por %p31, %p32
    %p35 = scmp.ne.s32.totalorder %s20, %s34
    %p36 = scmp.eq.s32.totalorder %s15, 0
    %p37 = por %p35, %p36
    %s39 = sadd.s32 %s38, 1
    %p42 = scmp.eq.s32.totalorder %s9, 7
    %p43 = scmp.ne.s32.totalorder %s38, %s40
    %p44 = scmp.eq.s32.totalorder %s9, 0
    %p45 = por %p43, %p44
    %p46 = scmp.ne.s32.totalorder %s38, %s40
    %p47 = scmp.eq.s32.totalorder %s14, 7
    %p48 = por %p46, %p47
    %p49 = scmp.ne.s32.totalorder %s40, %s41
    %p50 = scmp.eq.s32.totalorder %s14, 0
    %p51 = por %p49, %p50
    %p52 = scmp.ne.s32.totalorder %s40, %s41
    %p53 = scmp.eq.s32.totalorder %s15, 7
    %p54 = por %p52, %p53
    %p56 = scmp.ne.s32.totalorder %s41, %s55
    %p57 = scmp.eq.s32.totalorder %s15, 0
    %p58 = por %p56, %p57
    %s59 = ssub.s32 %s9, %s16
    %p60 = scmp.eq.s32.totalorder %s59, 0
    %s62 = sadd.s32 %s61, 1
    %s63 = scalar_select %p60, %s61, %s62
    %p66 = pneg %p60
    %p67 = scmp.eq.s32.totalorder %s9, 7
    %p68 = por %p66, %p67
    %p69 = scmp.ne.s32.totalorder %s61, %s64
    %p70 = scmp.eq.s32.totalorder %s9, 0
    %p71 = por %p69, %p70
    %p72 = scmp.ne.s32.totalorder %s61, %s64
    %p73 = scmp.eq.s32.totalorder %s14, 7
    %p74 = por %p72, %p73
    %p75 = scmp.ne.s32.totalorder %s64, %s65
    %p76 = scmp.eq.s32.totalorder %s14, 0
    %p77 = por %p75, %p76
    %p78 = scmp.ne.s32.totalorder %s64, %s65
    %p79 = scmp.eq.s32.totalorder %s15, 7
    %p80 = por %p78, %p79
    %p82 = scmp.ne.s32.totalorder %s65, %s81
    %p83 = scmp.eq.s32.totalorder %s15, 0
    %p84 = por %p82, %p83
    %s85 = ssub.s32 %s9, %s16
    %p86 = scmp.eq.s32.totalorder %s85, 0
    %s88 = sadd.s32 %s87, 1
    %s89 = scalar_select %p86, %s87, %s88
    %p92 = pneg %p86
    %p93 = scmp.eq.s32.totalorder %s9, 7
    %p94 = por %p92, %p93
    %p95 = scmp.ne.s32.totalorder %s87, %s90
    %p96 = scmp.eq.s32.totalorder %s9, 0
    %p97 = por %p95, %p96
    %p98 = scmp.ne.s32.totalorder %s87, %s90
    %p99 = scmp.eq.s32.totalorder %s14, 7
    %p100 = por %p98, %p99
    %p101 = scmp.ne.s32.totalorder %s90, %s91
    %p102 = scmp.eq.s32.totalorder %s14, 0
    %p103 = por %p101, %p102
    %p104 = scmp.ne.s32.totalorder %s90, %s91
    %p105 = scmp.eq.s32.totalorder %s15, 7
    %p106 = por %p104, %p105
    %p108 = scmp.ne.s32.totalorder %s91, %s107
    %p109 = scmp.eq.s32.totalorder %s15, 0
    %p110 = por %p108, %p109
    %p111 = scmp.le.s32.totalorder 1, %s9
    %p112 = scmp.lt.s32.totalorder %s9, 9
    %p113 = pnand %p111, %p112
    %p114 = pneg %p113
    // Predicated region
    $region9: #{tpu_custom_call.1} parent=5 // pred_check
      _
    $region10: #{tpu_custom_call.1} parent=5 // pred_check_branch
      %116 = sbr.rel (%p113) target = $region12
    $region11: #{tpu_custom_call.1} parent=5 // pred_region
      %s117 = ssub.s32 %s9, 1
      // Predicated region
      $region13: #{tpu_custom_call.1} parent=11 // pred_check
        %p118 = pneg %p30
      $region14: #{tpu_custom_call.1} parent=11 // pred_check_branch
        %120 = sbr.rel (%p118) target = $region16
      $region15: #{tpu_custom_call.1} parent=11 // pred_region
        _
      $region16: #{tpu_custom_call.1} parent=11 // pred_fallthru
        _
      // Predicated region
      $region17: #{tpu_custom_call.1} parent=11 // pred_check
        %p121 = pneg %p51
      $region18: #{tpu_custom_call.1} parent=11 // pred_check_branch
        %123 = sbr.rel (%p121) target = $region20
      $region19: #{tpu_custom_call.1} parent=11 // pred_region
        _
      $region20: #{tpu_custom_call.1} parent=11 // pred_fallthru
        _
    $region12: #{tpu_custom_call.1} parent=5 // pred_fallthru
      _
    %p124 = scmp.lt.s32.totalorder %s9, 8
    // Predicated region
    $region21: #{tpu_custom_call.1} parent=5 // pred_check
      %p125 = pneg %p124
    $region22: #{tpu_custom_call.1} parent=5 // pred_check_branch
      %127 = sbr.rel (%p125) target = $region24
    $region23: #{tpu_custom_call.1} parent=5 // pred_region
      // Predicated region
      $region25: #{tpu_custom_call.1} parent=23 // pred_check
        %p128 = pneg %p71
      $region26: #{tpu_custom_call.1} parent=23 // pred_check_branch
        %130 = sbr.rel (%p128) target = $region28
      $region27: #{tpu_custom_call.1} parent=23 // pred_region
        %s131 = smul.u32 2, %s9
        %p132 = scmp.lt.s32.totalorder %s131, 15
        %s133 = scalar_select %p132, %s131, 15
        %s134 = smul.addr %s133, 8
        %s135 = scalar_lea.vmem %s2, %s134
        %s136 = smul.u32 2, %s9
      $region28: #{tpu_custom_call.1} parent=23 // pred_fallthru
        _
    $region24: #{tpu_custom_call.1} parent=5 // pred_fallthru
      _
    %p137 = scmp.le.s32.totalorder 1, %s9
    %p138 = scmp.lt.s32.totalorder %s9, 9
    %p139 = pnand %p137, %p138
    %p140 = pneg %p139
    // Predicated region
    $region29: #{tpu_custom_call.1} parent=5 // pred_check
      _
    $region30: #{tpu_custom_call.1} parent=5 // pred_check_branch
      %142 = sbr.rel (%p139) target = $region32
    $region31: #{tpu_custom_call.1} parent=5 // pred_region
      %s143 = ssub.s32 %s9, 1
      %p144 = pneg %p30
      %p145 = pneg %p27
      %p146 = pneg %p51
      %p147 = pneg %p48
      %s148 = smul.u32 2, %s14
      %p149 = scmp.lt.s32.totalorder %s148, 15
      %s150 = scalar_select %p149, %s148, 15
      %s151 = smul.addr %s150, 8
      %s152 = scalar_lea.vmem %s2, %s151
      %p153 = pneg %p77
      %p154 = pneg %p74
      %p155 = pneg %p103
      %p156 = pneg %p100
      %s157 = smul.u32 4, %s14
      %p158 = scmp.lt.s32.totalorder %s157, 31
      %s159 = scalar_select %p158, %s157, 31
      %s160 = smul.addr %s159, 8
      %s161 = scalar_lea.vmem %s3, %s160
      %s162 = smul.u32 2, %s14
      %p163 = scmp.lt.s32.totalorder %s162, 15
      %s164 = scalar_select %p163, %s162, 15
      %s165 = smul.addr %s164, 8
      %s166 = scalar_lea.vmem %s2, %s165
      %s167 = smul.u32 2, %s14
      %s168 = smul.u32 4, %s14
      %p169 = scmp.lt.s32.totalorder %s168, 31
      %s170 = scalar_select %p169, %s168, 31
      %s171 = smul.addr %s170, 8
      %s172 = scalar_lea.vmem %s3, %s171
      %s173 = smul.u32 4, %s14
      %v174 = vld [vmem:[%s166] sm:$0xff]
      %v175 = vld [vmem:[%s166 + $0x8] sm:$0xff]
      %v176 = vld [vmem:[%s1] sm:$0xff]
      %v177 = vld [vmem:[%s1 + $0x8] sm:$0xff]
      %vm178 = vcmask 130048
      %v180 = vsel %vm178, %v174, 0
      %v183 = vsel %vm178, %v175, 0
      %185 = vmatpush.msra.mxu0 0.0
      %186 = vmatpush.msra.mxu0 0.0
      %187 = vmatpush.msra.mxu0 0.0
      %188 = vmatpush.msra.mxu0 0.0
      %189 = vmatpush.msra.mxu0 0.0
      %190 = vmatpush.msra.mxu0 0.0
      %191 = vmatpush.msra.mxu0 0.0
      %192 = vmatpush.msra.mxu0 0.0
      %193 = vmatpush.msra.mxu0 0.0
      %194 = vmatpush.msra.mxu0 0.0
      %195 = vmatpush.msra.mxu0 0.0
      %196 = vmatpush.msra.mxu0 0.0
      %197 = vmatpush.msra.mxu0 0.0
      %198 = vmatpush.msra.mxu0 0.0
      %199 = vmatpush.msra.mxu0 %v177
      %200 = vmatpush.msra.mxu0 %v176
      %201 = vmatmul.f32.gmra.mxu0 %v180
      %v202 = vpop.f32.mrf.mxu0
      %v203 = vadd.f32 0.0, %v202
      %204 = vmatmul.f32.gmra.mxu0 %v183
      %v205 = vpop.f32.mrf.mxu0
      %v206 = vadd.f32 0.0, %v205
      %207 = vdwg.mxu0
      %vm208 = vcmask 261120
      %209 = vst.msk [vmem:[#allocation2] sm:$0xff] %vm208, %v203
      %210 = vst.msk [vmem:[#allocation2 + $0x8] sm:$0xff] %vm208, %v206
      %v211 = vld [vmem:[%s0] sm:$0xff]
      %v212 = vld [vmem:[%s0 + $0x8] sm:$0xff]
      %v213 = vld [vmem:[%s0 + $0x10] sm:$0xff]
      %v214 = vld [vmem:[%s0 + $0x18] sm:$0xff]
      %v215 = vld [vmem:[#allocation2] sm:$0xff]
      %v216 = vld [vmem:[#allocation2 + $0x8] sm:$0xff]
      %v218 = vsel %vm178, %v211, 0
      %v221 = vsel %vm178, %v212, 0
      %v224 = vsel %vm178, %v213, 0
      %v227 = vsel %vm178, %v214, 0
      %229 = vmatpush.msra.mxu0 0.0
      %230 = vmatpush.msra.mxu0 0.0
      %231 = vmatpush.msra.mxu0 0.0
      %232 = vmatpush.msra.mxu0 0.0
      %233 = vmatpush.msra.mxu0 0.0
      %234 = vmatpush.msra.mxu0 0.0
      %235 = vmatpush.msra.mxu0 0.0
      %236 = vmatpush.msra.mxu0 0.0
      %237 = vmatpush.msra.mxu0 0.0
      %238 = vmatpush.msra.mxu0 0.0
      %239 = vmatpush.msra.mxu0 0.0
      %240 = vmatpush.msra.mxu0 0.0
      %241 = vmatpush.msra.mxu0 0.0
      %242 = vmatpush.msra.mxu0 0.0
      %243 = vmatpush.msra.mxu0 %v216
      %244 = vmatpush.msra.mxu0 %v215
      %245 = vmatmul.f32.gmra.mxu0 %v218
      %v246 = vpop.f32.mrf.mxu0
      %v247 = vadd.f32 0.0, %v246
      %248 = vmatmul.f32.gmra.mxu0 %v221
      %v249 = vpop.f32.mrf.mxu0
      %v250 = vadd.f32 0.0, %v249
      %251 = vmatmul.f32.gmra.mxu0 %v224
      %v252 = vpop.f32.mrf.mxu0
      %v253 = vadd.f32 0.0, %v252
      %254 = vmatmul.f32.gmra.mxu0 %v227
      %v255 = vpop.f32.mrf.mxu0
      %v256 = vadd.f32 0.0, %v255
      %257 = vdwg.mxu0
      %258 = vst.msk [vmem:[%s172] sm:$0xff] %vm208, %v247
      %259 = vst.msk [vmem:[%s172 + $0x8] sm:$0xff] %vm208, %v250
      %260 = vst.msk [vmem:[%s172 + $0x10] sm:$0xff] %vm208, %v253
      %261 = vst.msk [vmem:[%s172 + $0x18] sm:$0xff] %vm208, %v256
      %s262 = smul.u32 4, %s14
      %p263 = scmp.lt.s32.totalorder %s262, 31
      %s264 = scalar_select %p263, %s262, 31
      %s265 = smul.addr %s264, 8
      %s266 = scalar_lea.vmem %s3, %s265
      // Predicated region
      $region33: #{tpu_custom_call.1} parent=31 // pred_check
        %p267 = pneg %p100
      $region34: #{tpu_custom_call.1} parent=31 // pred_check_branch
        %269 = sbr.rel (%p267) target = $region36
      $region35: #{tpu_custom_call.1} parent=31 // pred_region
        %s270 = smul.u32 4, %s14
      $region36: #{tpu_custom_call.1} parent=31 // pred_fallthru
        _
    $region32: #{tpu_custom_call.1} parent=5 // pred_fallthru
      _
    %p271 = scmp.le.s32.totalorder 2, %s9
    // Predicated region
    $region37: #{tpu_custom_call.1} parent=5 // pred_check
      %p272 = pneg %p271
    $region38: #{tpu_custom_call.1} parent=5 // pred_check_branch
      %274 = sbr.rel (%p272) target = $region40
    $region39: #{tpu_custom_call.1} parent=5 // pred_region
      %s275 = ssub.s32 %s9, 2
      // Predicated region
      $region41: #{tpu_custom_call.1} parent=39 // pred_check
        %p276 = pneg %p106
      $region42: #{tpu_custom_call.1} parent=39 // pred_check_branch
        %278 = sbr.rel (%p276) target = $region44
      $region43: #{tpu_custom_call.1} parent=39 // pred_region
        %s279 = smul.u32 4, %s15
        %p280 = scmp.lt.s32.totalorder %s279, 31
        %s281 = scalar_select %p280, %s279, 31
        %s282 = smul.addr %s281, 8
        %s283 = scalar_lea.vmem %s3, %s282
      $region44: #{tpu_custom_call.1} parent=39 // pred_fallthru
        _
    $region40: #{tpu_custom_call.1} parent=5 // pred_fallthru
      _
  $region6: #{tpu_custom_call.1} parent=0 // loop_footer
    %s13 = sadd.s32 1, %s9
  $region7: #{tpu_custom_call.1} parent=0 // loop_footer_branch
    %8 = sbr.rel target = $region3
  $region8: #{tpu_custom_call.1} parent=0 // loop_exit
    _

</llo_original>
